<compile_context>
chip_gen: v6e
topology: v6e:2x2x1
jax: 0.10.0
libtpu: 0.0.40
codegen_flags: <defaults>
</compile_context>

<pallas_src>
import jax
import jax.numpy as jnp
from jax import lax
from jax.experimental import pallas as pl
from jax.experimental.pallas import tpu as pltpu

EPS = 1e-5
_TARGET_TILE_ROWS = 1024          # 1024 x 128 x f32 = 512 KiB per buffer
_VMEM_LIMIT_BYTES = 32 * 1024 * 1024


def _pick_tile_rows(n_rows, target=_TARGET_TILE_ROWS):
    """Largest divisor of n_rows that is a multiple of 8 and <= target, else full."""
    if n_rows <= target:
        return n_rows
    t = (target // 8) * 8
    while t >= 8:
        if n_rows % t == 0:
            return t
        t -= 8
    return n_rows


def _make_stats_kernel(n_feat, fold, n_total, eps):
    """Pass 1: accumulate per-lane sum / sum_sq; finalize per-lane scale/bias."""

    def stats_kernel(x_ref, gamma_ref, beta_ref, scale_ref, bias_ref,
                     sum_ref, sq_ref):
        i = pl.program_id(0)

        @pl.when(i == 0)
        def _init():
            sum_ref[...] = jnp.zeros_like(sum_ref)
            sq_ref[...] = jnp.zeros_like(sq_ref)
            scale_ref[...] = jnp.zeros_like(scale_ref)
            bias_ref[...] = jnp.zeros_like(bias_ref)

        x = x_ref[...].astype(jnp.float32)
        sum_ref[...] += jnp.sum(x, axis=0, keepdims=True)
        sq_ref[...] += jnp.sum(x * x, axis=0, keepdims=True)

        @pl.when(i == pl.num_programs(0) - 1)
        def _finalize():
            # Fold per-lane partials into per-channel totals.  Lane l holds
            # channel l % n_feat, so summing cyclic rotations by k*n_feat
            # (k = 1..fold-1) leaves EVERY lane holding its channel's total
            # (fold + broadcast-back in one shot, no reshape/transpose).
            s = sum_ref[...]
            q = sq_ref[...]
            for k in range(1, fold):
                s = s + pltpu.roll(sum_ref[...], shift=k * n_feat, axis=1)
                q = q + pltpu.roll(sq_ref[...], shift=k * n_feat, axis=1)
            inv_n = jnp.float32(1.0 / n_total)
            mean = s * inv_n
            var = q * inv_n - mean * mean          # biased batch variance
            inv_std = lax.rsqrt(var + jnp.float32(eps))
            scale = gamma_ref[...].astype(jnp.float32) * inv_std
            scale_ref[...] = scale
            bias_ref[...] = beta_ref[...].astype(jnp.float32) - mean * scale

    return stats_kernel


def _normalize_kernel(x_ref, scale_ref, bias_ref, o_ref):
    """Pass 2: y = x * scale + bias (per-lane scale/bias broadcast over rows)."""
    o_ref[...] = (x_ref[...].astype(jnp.float32) * scale_ref[...]
                  + bias_ref[...]).astype(o_ref.dtype)


def bnview_forward(x, gamma, beta, n_feat):
    """Pallas implementation of BNView.forward (training-mode batch stats)."""
    x_shape = x.shape
    b = x_shape[0]
    # view(B, -1, n_feat): channel of an element = its innermost flat index % n_feat
    x2d = x.reshape(b, -1, n_feat).reshape(-1, n_feat)      # (N, F)
    n, f = x2d.shape

    # Lane-dense repack: (N, F) -> (N/fold, F*fold) with lane l <-> channel l % F.
    if f < 128 and 128 % f == 0 and n % (128 // f) == 0:
        fold = 128 // f
    else:
        fold = 1
    n_p = n // fold
    f_p = f * fold
    x_p = x2d.reshape(n_p, f_p)

    # gamma/beta tiled to the per-lane layout (lane l -> channel l % F).
    gamma_lane = jnp.tile(gamma.reshape(1, f).astype(jnp.float32), (1, fold))
    beta_lane = jnp.tile(beta.reshape(1, f).astype(jnp.float32), (1, fold))

    tile_rows = _pick_tile_rows(n_p)
    n_tiles = n_p // tile_rows
    itemsize = int(jnp.dtype(x.dtype).itemsize)

    # ---- Pass 1: per-channel statistics -> per-lane scale/bias ------------
    scale_lane, bias_lane = pl.pallas_call(
        _make_stats_kernel(n_feat=f, fold=fold, n_total=n, eps=EPS),
        out_shape=(jax.ShapeDtypeStruct((1, f_p), jnp.float32),
                   jax.ShapeDtypeStruct((1, f_p), jnp.float32)),
        grid=(n_tiles,),
        in_specs=[
            pl.BlockSpec((tile_rows, f_p), lambda i: (i, 0)),
            pl.BlockSpec((1, f_p), lambda i: (0, 0)),
            pl.BlockSpec((1, f_p), lambda i: (0, 0)),
        ],
        out_specs=(
            pl.BlockSpec((1, f_p), lambda i: (0, 0)),
            pl.BlockSpec((1, f_p), lambda i: (0, 0)),
        ),
        scratch_shapes=[
            pltpu.VMEM((1, f_p), jnp.float32),   # running sum per lane
            pltpu.VMEM((1, f_p), jnp.float32),   # running sum of squares per lane
        ],
        compiler_params=pltpu.CompilerParams(
            dimension_semantics=("arbitrary",),
            vmem_limit_bytes=_VMEM_LIMIT_BYTES),
        cost_estimate=pl.CostEstimate(
            flops=3 * n * f,
            transcendentals=f,
            bytes_accessed=n * f * itemsize + 3 * f_p * 4),
    )(x_p, gamma_lane, beta_lane)

    # ---- Pass 2: streaming normalize (single FMA per element) -------------
    out_p = pl.pallas_call(
        _normalize_kernel,
        out_shape=jax.ShapeDtypeStruct((n_p, f_p), x.dtype),
        grid=(n_tiles,),
        in_specs=[
            pl.BlockSpec((tile_rows, f_p), lambda i: (i, 0)),
            pl.BlockSpec((1, f_p), lambda i: (0, 0)),
            pl.BlockSpec((1, f_p), lambda i: (0, 0)),
        ],
        out_specs=pl.BlockSpec((tile_rows, f_p), lambda i: (i, 0)),
        compiler_params=pltpu.CompilerParams(
            dimension_semantics=("parallel",),
            vmem_limit_bytes=_VMEM_LIMIT_BYTES),
        cost_estimate=pl.CostEstimate(
            flops=2 * n * f,
            transcendentals=0,
            bytes_accessed=2 * n * f * itemsize + 2 * f_p * 4),
    )(x_p, scale_lane, bias_lane)

    return out_p.reshape(n, f).reshape(x_shape)


def bnview_reference(x, gamma, beta, n_feat):
    """Pure-JAX reference matching PyTorch BatchNorm1d (training mode)."""
    x_shape = x.shape
    x2d = x.reshape(x_shape[0], -1, n_feat).reshape(-1, n_feat).astype(jnp.float32)
    mean = jnp.mean(x2d, axis=0, keepdims=True)
    var = jnp.mean((x2d - mean) ** 2, axis=0, keepdims=True)
    y = (x2d - mean) * lax.rsqrt(var + EPS) * gamma.reshape(1, n_feat) \
        + beta.reshape(1, n_feat)
    return y.astype(x.dtype).reshape(x_shape)


if __name__ == "__main__":
    n_feat = 16

    # Small shape consistent with the module: (B, C, H, W), C*H*W % n_feat == 0.
    x_shape = (2, 4, 16, 16)
    key = jax.random.PRNGKey(0)
    x = jax.random.normal(key, x_shape, dtype=jnp.float32)
    gamma = jnp.ones((1, n_feat), dtype=jnp.float32)   # PyTorch default weight=1
    beta = jnp.zeros((1, n_feat), dtype=jnp.float32)   # PyTorch default bias=0

    out = jax.block_until_ready(bnview_forward(x, gamma, beta, n_feat))
    ref = bnview_reference(x, gamma, beta, n_feat)
    assert out.shape == x.shape
    assert jnp.allclose(out, ref, rtol=1e-5, atol=5e-5), "mismatch vs reference (small)"

    # Larger input to exercise the multi-tile path (grid > 1) and nontrivial affine.
    kx, kg, kb = jax.random.split(jax.random.PRNGKey(1), 3)
    x_big = jax.random.normal(kx, (16, 16, 32, 32), dtype=jnp.float32) * 1.5 + 0.3
    gamma2 = 1.0 + 0.1 * jax.random.normal(kg, (1, n_feat), dtype=jnp.float32)
    beta2 = 0.1 * jax.random.normal(kb, (1, n_feat), dtype=jnp.float32)

    out2 = jax.block_until_ready(bnview_forward(x_big, gamma2, beta2, n_feat))
    ref2 = bnview_reference(x_big, gamma2, beta2, n_feat)
    assert out2.shape == x_big.shape
    assert jnp.allclose(out2, ref2, rtol=1e-5, atol=5e-5), "mismatch vs reference (tiled)"

    print("KERNEL_OK")
</pallas_src>

<mosaic_0001>
module attributes {stable_mosaic.version = 11 : i64} {
  func.func @stats_kernel(%arg0: i32, %arg1: memref<16x128xf32, #tpu.memory_space<vmem>>, %arg2: memref<1x128xf32, #tpu.memory_space<vmem>>, %arg3: memref<1x128xf32, #tpu.memory_space<vmem>>, %arg4: memref<1x128xf32, #tpu.memory_space<vmem>>, %arg5: memref<1x128xf32, #tpu.memory_space<vmem>>, %arg6: memref<1x128xf32, #tpu.memory_space<vmem>>, %arg7: memref<1x128xf32, #tpu.memory_space<vmem>>) attributes {dimension_semantics = [#tpu.dimension_semantics<arbitrary>], iteration_bounds = array<i64: 1>, scalar_prefetch = 0 : i64, scratch_operands = 2 : i64, tpu.core_type = #tpu.core_type<tc>, window_params = [{transform_indices = @transform_0, window_bounds = array<i64: 16, 128>}, {pipeline_mode = #tpu.pipeline_mode<synchronous>, transform_indices = @transform_1, window_bounds = array<i64: 1, 128>}, {pipeline_mode = #tpu.pipeline_mode<synchronous>, transform_indices = @transform_2, window_bounds = array<i64: 1, 128>}, {pipeline_mode = #tpu.pipeline_mode<synchronous>, transform_indices = @transform_3, window_bounds = array<i64: 1, 128>}, {pipeline_mode = #tpu.pipeline_mode<synchronous>, transform_indices = @transform_4, window_bounds = array<i64: 1, 128>}]} {
    %c0_i32 = arith.constant 0 : i32
    %0 = arith.cmpi eq, %arg0, %c0_i32 : i32
    %1 = arith.extui %0 : i1 to i32
    %c0_i32_0 = arith.constant 0 : i32
    %2 = arith.cmpi ne, %1, %c0_i32_0 : i32
    scf.if %2 {
      %cst_13 = arith.constant 0.000000e+00 : f32
      %18 = vector.broadcast %cst_13 : f32 to vector<1x128xf32>
      %c0_14 = arith.constant 0 : index
      %c0_15 = arith.constant 0 : index
      %19 = vector.load %arg6[%c0_14, %c0_15] : memref<1x128xf32, #tpu.memory_space<vmem>>, vector<1x128xf32>
      tpu.vector_store %arg6[%c0_14, %c0_15], %18 {strides = array<i32>} : memref<1x128xf32, #tpu.memory_space<vmem>>, vector<1x128xf32>,
      %cst_16 = arith.constant 0.000000e+00 : f32
      %20 = vector.broadcast %cst_16 : f32 to vector<1x128xf32>
      %c0_17 = arith.constant 0 : index
      %c0_18 = arith.constant 0 : index
      %21 = vector.load %arg7[%c0_17, %c0_18] : memref<1x128xf32, #tpu.memory_space<vmem>>, vector<1x128xf32>
      tpu.vector_store %arg7[%c0_17, %c0_18], %20 {strides = array<i32>} : memref<1x128xf32, #tpu.memory_space<vmem>>, vector<1x128xf32>,
      %cst_19 = arith.constant 0.000000e+00 : f32
      %22 = vector.broadcast %cst_19 : f32 to vector<1x128xf32>
      %c0_20 = arith.constant 0 : index
      %c0_21 = arith.constant 0 : index
      %23 = vector.load %arg4[%c0_20, %c0_21] : memref<1x128xf32, #tpu.memory_space<vmem>>, vector<1x128xf32>
      tpu.vector_store %arg4[%c0_20, %c0_21], %22 {strides = array<i32>} : memref<1x128xf32, #tpu.memory_space<vmem>>, vector<1x128xf32>,
      %cst_22 = arith.constant 0.000000e+00 : f32
      %24 = vector.broadcast %cst_22 : f32 to vector<1x128xf32>
      %c0_23 = arith.constant 0 : index
      %c0_24 = arith.constant 0 : index
      %25 = vector.load %arg5[%c0_23, %c0_24] : memref<1x128xf32, #tpu.memory_space<vmem>>, vector<1x128xf32>
      tpu.vector_store %arg5[%c0_23, %c0_24], %24 {strides = array<i32>} : memref<1x128xf32, #tpu.memory_space<vmem>>, vector<1x128xf32>,
    } else {
    }
    %c0 = arith.constant 0 : index
    %c0_1 = arith.constant 0 : index
    %3 = vector.load %arg1[%c0, %c0_1] : memref<16x128xf32, #tpu.memory_space<vmem>>, vector<16x128xf32>
    %c0_2 = arith.constant 0 : index
    %c0_3 = arith.constant 0 : index
    %4 = vector.load %arg6[%c0_2, %c0_3] : memref<1x128xf32, #tpu.memory_space<vmem>>, vector<1x128xf32>
    %cst = arith.constant dense<0.000000e+00> : vector<128xf32>
    %5 = vector.multi_reduction <add>, %3, %cst [0] : vector<16x128xf32> to vector<128xf32>
    %6 = vector.shape_cast %5 : vector<128xf32> to vector<1x128xf32>
    %7 = arith.addf %4, %6 : vector<1x128xf32>
    %c0_4 = arith.constant 0 : index
    %c0_5 = arith.constant 0 : index
    %8 = vector.load %arg6[%c0_4, %c0_5] : memref<1x128xf32, #tpu.memory_space<vmem>>, vector<1x128xf32>
    tpu.vector_store %arg6[%c0_4, %c0_5], %7 {strides = array<i32>} : memref<1x128xf32, #tpu.memory_space<vmem>>, vector<1x128xf32>,
    %c0_6 = arith.constant 0 : index
    %c0_7 = arith.constant 0 : index
    %9 = vector.load %arg7[%c0_6, %c0_7] : memref<1x128xf32, #tpu.memory_space<vmem>>, vector<1x128xf32>
    %10 = arith.mulf %3, %3 : vector<16x128xf32>
    %cst_8 = arith.constant dense<0.000000e+00> : vector<128xf32>
    %11 = vector.multi_reduction <add>, %10, %cst_8 [0] : vector<16x128xf32> to vector<128xf32>
    %12 = vector.shape_cast %11 : vector<128xf32> to vector<1x128xf32>
    %13 = arith.addf %9, %12 : vector<1x128xf32>
    %c0_9 = arith.constant 0 : index
    %c0_10 = arith.constant 0 : index
    %14 = vector.load %arg7[%c0_9, %c0_10] : memref<1x128xf32, #tpu.memory_space<vmem>>, vector<1x128xf32>
    tpu.vector_store %arg7[%c0_9, %c0_10], %13 {strides = array<i32>} : memref<1x128xf32, #tpu.memory_space<vmem>>, vector<1x128xf32>,
    %c0_i32_11 = arith.constant 0 : i32
    %15 = arith.cmpi eq, %arg0, %c0_i32_11 : i32
    %16 = arith.extui %15 : i1 to i32
    %c0_i32_12 = arith.constant 0 : i32
    %17 = arith.cmpi ne, %16, %c0_i32_12 : i32
    scf.if %17 {
      %c0_13 = arith.constant 0 : index
      %c0_14 = arith.constant 0 : index
      %18 = vector.load %arg6[%c0_13, %c0_14] : memref<1x128xf32, #tpu.memory_space<vmem>>, vector<1x128xf32>
      %c0_15 = arith.constant 0 : index
      %c0_16 = arith.constant 0 : index
      %19 = vector.load %arg7[%c0_15, %c0_16] : memref<1x128xf32, #tpu.memory_space<vmem>>, vector<1x128xf32>
      %c0_17 = arith.constant 0 : index
      %c0_18 = arith.constant 0 : index
      %20 = vector.load %arg6[%c0_17, %c0_18] : memref<1x128xf32, #tpu.memory_space<vmem>>, vector<1x128xf32>
      %c16_i32 = arith.constant 16 : i32
      %21 = tpu.dynamic_rotate %20 by %c16_i32 dim 1 : vector<1x128xf32>, i32 -> vector<1x128xf32>
      %22 = arith.addf %18, %21 : vector<1x128xf32>
      %c0_19 = arith.constant 0 : index
      %c0_20 = arith.constant 0 : index
      %23 = vector.load %arg7[%c0_19, %c0_20] : memref<1x128xf32, #tpu.memory_space<vmem>>, vector<1x128xf32>
      %c16_i32_21 = arith.constant 16 : i32
      %24 = tpu.dynamic_rotate %23 by %c16_i32_21 dim 1 : vector<1x128xf32>, i32 -> vector<1x128xf32>
      %25 = arith.addf %19, %24 : vector<1x128xf32>
      %c0_22 = arith.constant 0 : index
      %c0_23 = arith.constant 0 : index
      %26 = vector.load %arg6[%c0_22, %c0_23] : memref<1x128xf32, #tpu.memory_space<vmem>>, vector<1x128xf32>
      %c32_i32 = arith.constant 32 : i32
      %27 = tpu.dynamic_rotate %26 by %c32_i32 dim 1 : vector<1x128xf32>, i32 -> vector<1x128xf32>
      %28 = arith.addf %22, %27 : vector<1x128xf32>
      %c0_24 = arith.constant 0 : index
      %c0_25 = arith.constant 0 : index
      %29 = vector.load %arg7[%c0_24, %c0_25] : memref<1x128xf32, #tpu.memory_space<vmem>>, vector<1x128xf32>
      %c32_i32_26 = arith.constant 32 : i32
      %30 = tpu.dynamic_rotate %29 by %c32_i32_26 dim 1 : vector<1x128xf32>, i32 -> vector<1x128xf32>
      %31 = arith.addf %25, %30 : vector<1x128xf32>
      %c0_27 = arith.constant 0 : index
      %c0_28 = arith.constant 0 : index
      %32 = vector.load %arg6[%c0_27, %c0_28] : memref<1x128xf32, #tpu.memory_space<vmem>>, vector<1x128xf32>
      %c48_i32 = arith.constant 48 : i32
      %33 = tpu.dynamic_rotate %32 by %c48_i32 dim 1 : vector<1x128xf32>, i32 -> vector<1x128xf32>
      %34 = arith.addf %28, %33 : vector<1x128xf32>
      %c0_29 = arith.constant 0 : index
      %c0_30 = arith.constant 0 : index
      %35 = vector.load %arg7[%c0_29, %c0_30] : memref<1x128xf32, #tpu.memory_space<vmem>>, vector<1x128xf32>
      %c48_i32_31 = arith.constant 48 : i32
      %36 = tpu.dynamic_rotate %35 by %c48_i32_31 dim 1 : vector<1x128xf32>, i32 -> vector<1x128xf32>
      %37 = arith.addf %31, %36 : vector<1x128xf32>
      %c0_32 = arith.constant 0 : index
      %c0_33 = arith.constant 0 : index
      %38 = vector.load %arg6[%c0_32, %c0_33] : memref<1x128xf32, #tpu.memory_space<vmem>>, vector<1x128xf32>
      %c64_i32 = arith.constant 64 : i32
      %39 = tpu.dynamic_rotate %38 by %c64_i32 dim 1 : vector<1x128xf32>, i32 -> vector<1x128xf32>
      %40 = arith.addf %34, %39 : vector<1x128xf32>
      %c0_34 = arith.constant 0 : index
      %c0_35 = arith.constant 0 : index
      %41 = vector.load %arg7[%c0_34, %c0_35] : memref<1x128xf32, #tpu.memory_space<vmem>>, vector<1x128xf32>
      %c64_i32_36 = arith.constant 64 : i32
      %42 = tpu.dynamic_rotate %41 by %c64_i32_36 dim 1 : vector<1x128xf32>, i32 -> vector<1x128xf32>
      %43 = arith.addf %37, %42 : vector<1x128xf32>
      %c0_37 = arith.constant 0 : index
      %c0_38 = arith.constant 0 : index
      %44 = vector.load %arg6[%c0_37, %c0_38] : memref<1x128xf32, #tpu.memory_space<vmem>>, vector<1x128xf32>
      %c80_i32 = arith.constant 80 : i32
      %45 = tpu.dynamic_rotate %44 by %c80_i32 dim 1 : vector<1x128xf32>, i32 -> vector<1x128xf32>
      %46 = arith.addf %40, %45 : vector<1x128xf32>
      %c0_39 = arith.constant 0 : index
      %c0_40 = arith.constant 0 : index
      %47 = vector.load %arg7[%c0_39, %c0_40] : memref<1x128xf32, #tpu.memory_space<vmem>>, vector<1x128xf32>
      %c80_i32_41 = arith.constant 80 : i32
      %48 = tpu.dynamic_rotate %47 by %c80_i32_41 dim 1 : vector<1x128xf32>, i32 -> vector<1x128xf32>
      %49 = arith.addf %43, %48 : vector<1x128xf32>
      %c0_42 = arith.constant 0 : index
      %c0_43 = arith.constant 0 : index
      %50 = vector.load %arg6[%c0_42, %c0_43] : memref<1x128xf32, #tpu.memory_space<vmem>>, vector<1x128xf32>
      %c96_i32 = arith.constant 96 : i32
      %51 = tpu.dynamic_rotate %50 by %c96_i32 dim 1 : vector<1x128xf32>, i32 -> vector<1x128xf32>
      %52 = arith.addf %46, %51 : vector<1x128xf32>
      %c0_44 = arith.constant 0 : index
      %c0_45 = arith.constant 0 : index
      %53 = vector.load %arg7[%c0_44, %c0_45] : memref<1x128xf32, #tpu.memory_space<vmem>>, vector<1x128xf32>
      %c96_i32_46 = arith.constant 96 : i32
      %54 = tpu.dynamic_rotate %53 by %c96_i32_46 dim 1 : vector<1x128xf32>, i32 -> vector<1x128xf32>
      %55 = arith.addf %49, %54 : vector<1x128xf32>
      %c0_47 = arith.constant 0 : index
      %c0_48 = arith.constant 0 : index
      %56 = vector.load %arg6[%c0_47, %c0_48] : memref<1x128xf32, #tpu.memory_space<vmem>>, vector<1x128xf32>
      %c112_i32 = arith.constant 112 : i32
      %57 = tpu.dynamic_rotate %56 by %c112_i32 dim 1 : vector<1x128xf32>, i32 -> vector<1x128xf32>
      %58 = arith.addf %52, %57 : vector<1x128xf32>
      %c0_49 = arith.constant 0 : index
      %c0_50 = arith.constant 0 : index
      %59 = vector.load %arg7[%c0_49, %c0_50] : memref<1x128xf32, #tpu.memory_space<vmem>>, vector<1x128xf32>
      %c112_i32_51 = arith.constant 112 : i32
      %60 = tpu.dynamic_rotate %59 by %c112_i32_51 dim 1 : vector<1x128xf32>, i32 -> vector<1x128xf32>
      %61 = arith.addf %55, %60 : vector<1x128xf32>
      %cst_52 = arith.constant 7.812500e-03 : f32
      %62 = vector.broadcast %cst_52 : f32 to vector<1x128xf32>
      %63 = arith.mulf %58, %62 : vector<1x128xf32>
      %cst_53 = arith.constant 7.812500e-03 : f32
      %64 = vector.broadcast %cst_53 : f32 to vector<1x128xf32>
      %65 = arith.mulf %61, %64 : vector<1x128xf32>
      %66 = arith.mulf %63, %63 : vector<1x128xf32>
      %67 = arith.subf %65, %66 : vector<1x128xf32>
      %cst_54 = arith.constant 9.99999974E-6 : f32
      %68 = vector.broadcast %cst_54 : f32 to vector<1x128xf32>
      %69 = arith.addf %67, %68 : vector<1x128xf32>
      %70 = math.rsqrt %69 : vector<1x128xf32>
      %c0_55 = arith.constant 0 : index
      %c0_56 = arith.constant 0 : index
      %71 = vector.load %arg2[%c0_55, %c0_56] : memref<1x128xf32, #tpu.memory_space<vmem>>, vector<1x128xf32>
      %72 = arith.mulf %71, %70 : vector<1x128xf32>
      %c0_57 = arith.constant 0 : index
      %c0_58 = arith.constant 0 : index
      %73 = vector.load %arg4[%c0_57, %c0_58] : memref<1x128xf32, #tpu.memory_space<vmem>>, vector<1x128xf32>
      tpu.vector_store %arg4[%c0_57, %c0_58], %72 {strides = array<i32>} : memref<1x128xf32, #tpu.memory_space<vmem>>, vector<1x128xf32>,
      %c0_59 = arith.constant 0 : index
      %c0_60 = arith.constant 0 : index
      %74 = vector.load %arg3[%c0_59, %c0_60] : memref<1x128xf32, #tpu.memory_space<vmem>>, vector<1x128xf32>
      %75 = arith.mulf %63, %72 : vector<1x128xf32>
      %76 = arith.subf %74, %75 : vector<1x128xf32>
      %c0_61 = arith.constant 0 : index
      %c0_62 = arith.constant 0 : index
      %77 = vector.load %arg5[%c0_61, %c0_62] : memref<1x128xf32, #tpu.memory_space<vmem>>, vector<1x128xf32>
      tpu.vector_store %arg5[%c0_61, %c0_62], %76 {strides = array<i32>} : memref<1x128xf32, #tpu.memory_space<vmem>>, vector<1x128xf32>,
    } else {
    }
    return
  }
  func.func @transform_0(%arg0: i32) -> (i32, i32) {
    %c0_i32 = arith.constant 0 : i32
    %c0_i32_0 = arith.constant 0 : i32
    return %arg0, %c0_i32 : i32, i32
  }
  func.func @transform_1(%arg0: i32) -> (i32, i32) {
    %c0_i32 = arith.constant 0 : i32
    %c0_i32_0 = arith.constant 0 : i32
    %c0_i32_1 = arith.constant 0 : i32
    return %c0_i32, %c0_i32_0 : i32, i32
  }
  func.func @transform_2(%arg0: i32) -> (i32, i32) {
    %c0_i32 = arith.constant 0 : i32
    %c0_i32_0 = arith.constant 0 : i32
    %c0_i32_1 = arith.constant 0 : i32
    return %c0_i32, %c0_i32_0 : i32, i32
  }
  func.func @transform_3(%arg0: i32) -> (i32, i32) {
    %c0_i32 = arith.constant 0 : i32
    %c0_i32_0 = arith.constant 0 : i32
    %c0_i32_1 = arith.constant 0 : i32
    return %c0_i32, %c0_i32_0 : i32, i32
  }
  func.func @transform_4(%arg0: i32) -> (i32, i32) {
    %c0_i32 = arith.constant 0 : i32
    %c0_i32_0 = arith.constant 0 : i32
    %c0_i32_1 = arith.constant 0 : i32
    return %c0_i32, %c0_i32_0 : i32, i32
  }
}

</mosaic_0001>

<llo_original>
// kernel: tpu_custom_call.1
$region0: #{tpu_custom_call.1}
  #allocation0 [shape = 'u32[]', space=smem, size = 0x4, offset = 0x4, fixed_abs, tag = 'smem constant byte address 0x4 - core index']
  #allocation1 [shape = 'u32[144,128]{1,0:T(1,128)}', space=vmem, size = 0x12000, scoped, tag = 'internal scratch']
  #allocation2 [shape = 'f32[1,128]{1,0:T(1,128)}', space=vmem, size = 0x200, scoped, tag = 'scratch operand']
  #allocation3 [shape = 'f32[1,128]{1,0:T(1,128)}', space=vmem, size = 0x200, scoped, tag = 'scratch operand']
  %s0 = inlined_call_operand.hbm [shape: f32[16,128], index: 0, kind: input, shape index: {}]
  %s1 = inlined_call_operand.vmem [shape: f32[1,128], index: 1, kind: input, shape index: {}]
  %s2 = inlined_call_operand.vmem [shape: f32[1,128], index: 2, kind: input, shape index: {}]
  %s3 = inlined_call_operand.hbm [shape: f32[1,128], index: 3, kind: output, shape index: {0}]
  %s4 = inlined_call_operand.hbm [shape: f32[1,128], index: 4, kind: output, shape index: {1}]
  %5 = xla_tuple %s3, %s4
  %s6 = sld [smem:[#allocation0]]
  $region42: #{tpu_custom_call.1} parent=0
    _
  %s8 = ssub.s32 1, %s6
  %s9 = scalar_select 0, %s8, %s6
  $region1: #{tpu_custom_call.1} parent=0
    #allocation4 [shape = 'u8[8192]{0}', space=vmem, size = 0x2000, scoped, tag = 'input window, operand 0, single buffered']
    #allocation5 [shape = 's32[1]{0}', space=sflag, size = 0x4, scoped, tag = 'scoped memory for tpu_custom_call.1']
    #allocation6 [shape = 's32[1]{0}', space=sflag, size = 0x4, scoped, tag = 'scoped memory for tpu_custom_call.1']
    #allocation7 [shape = 'u8[512]{0}', space=vmem, size = 0x400, scoped, tag = 'output window, operand 0, single buffered']
    #allocation8 [shape = 'u8[512]{0}', space=vmem, size = 0x400, scoped, tag = 'output window, operand 1, single buffered']
    #allocation9 [shape = 's32[1]{0}', space=sflag, size = 0x4, scoped, tag = 'scoped memory for tpu_custom_call.1']
    %10 = vsyncpa [#allocation5], 0
    %11 = vsyncpa [#allocation6], 0
    %12 = vsyncpa [#allocation9], 0
    // Predicated region
    $region2: #{tpu_custom_call.1} parent=1 // pred_check
      _
    $region3: #{tpu_custom_call.1} parent=1 // pred_check_branch
      %14 = sbr.rel (0) target = $region5
    $region4: #{tpu_custom_call.1} parent=1 // pred_region
      %s16 = ssub.s32 256, 256
      %17 = vsyncadd [#allocation5], %s16
      %s18 = sshll.u32 [#allocation4], 4
      %s19 = int_to_ptr.vmem [resolvable:$true] %s18
      %24 = dma.hbm_to_vmem [thread:$0]  %s0, 256, %s19, [#allocation5], 128, 128, 8
    $region5: #{tpu_custom_call.1} parent=1 // pred_fallthru
      _
    // Predicated region
    $region6: #{tpu_custom_call.1} parent=1 // pred_check
      _
    $region7: #{tpu_custom_call.1} parent=1 // pred_check_branch
      %26 = sbr.rel (0) target = $region9
    $region8: #{tpu_custom_call.1} parent=1 // pred_region
      _
    $region9: #{tpu_custom_call.1} parent=1 // pred_fallthru
      _
    // Predicated region
    $region10: #{tpu_custom_call.1} parent=1 // pred_check
      _
    $region11: #{tpu_custom_call.1} parent=1 // pred_check_branch
      %28 = sbr.rel (0) target = $region13
    $region12: #{tpu_custom_call.1} parent=1 // pred_region
      _
    $region13: #{tpu_custom_call.1} parent=1 // pred_fallthru
      _
    // Predicated region
    $region14: #{tpu_custom_call.1} parent=1 // pred_check
      _
    $region15: #{tpu_custom_call.1} parent=1 // pred_check_branch
      %30 = sbr.rel (0) target = $region17
    $region16: #{tpu_custom_call.1} parent=1 // pred_region
      %31 = dma.done [#allocation5], 256
    $region17: #{tpu_custom_call.1} parent=1 // pred_fallthru
      _
    %p32 = scmp.eq.s32.totalorder 0, 0
    // Predicated region
    $region18: #{tpu_custom_call.1} parent=1 // pred_check
      %p33 = pneg %p32
    $region19: #{tpu_custom_call.1} parent=1 // pred_check_branch
      %35 = sbr.rel (%p33) target = $region21
    $region20: #{tpu_custom_call.1} parent=1 // pred_region
      %36 = vst [vmem:[#allocation2] sm:$0x1] 0.0
      %37 = vst [vmem:[#allocation3] sm:$0x1] 0.0
      %38 = vst [vmem:[#allocation7] sm:$0x1] 0.0
      %39 = vst [vmem:[#allocation8] sm:$0x1] 0.0
    $region21: #{tpu_custom_call.1} parent=1 // pred_fallthru
      _
    %v40 = vld [vmem:[#allocation4] sm:$0xff]
    %v41 = vld [vmem:[#allocation4 + $0x8] sm:$0xff]
    %v42 = vld [vmem:[#allocation2] sm:$0x1]
    %v43 = vadd.f32 %v40, %v41
    %v44 = vrot.slane %v43, 4
    %v45 = vadd.f32 %v43, %v44
    %v46 = vrot.slane %v45, 2
    %v47 = vadd.f32 %v45, %v46
    %v48 = vrot.slane %v47, 1
    %v49 = vadd.f32 %v47, %v48
    %v50 = vadd.f32 %v42, %v49
    %51 = vst [vmem:[#allocation2] sm:$0x1] %v50
    %v52 = vld [vmem:[#allocation3] sm:$0x1]
    %v53 = vmul.f32 %v40, %v40
    %v54 = vmul.f32 %v41, %v41
    %v55 = vadd.f32 %v53, %v54
    %v56 = vrot.slane %v55, 4
    %v57 = vadd.f32 %v55, %v56
    %v58 = vrot.slane %v57, 2
    %v59 = vadd.f32 %v57, %v58
    %v60 = vrot.slane %v59, 1
    %v61 = vadd.f32 %v59, %v60
    %v62 = vadd.f32 %v52, %v61
    %63 = vst [vmem:[#allocation3] sm:$0x1] %v62
    // Predicated region
    $region22: #{tpu_custom_call.1} parent=1 // pred_check
      %p64 = pneg %p32
    $region23: #{tpu_custom_call.1} parent=1 // pred_check_branch
      %66 = sbr.rel (%p64) target = $region25
    $region24: #{tpu_custom_call.1} parent=1 // pred_region
      %v67 = vld [vmem:[#allocation2] sm:$0x1]
      %v68 = vld [vmem:[#allocation3] sm:$0x1]
      %69 = vrot.lane.b32.xlu0 %v67, 16
      %v70 = vpop.permute.xlu0 %69
      %v71 = vadd.f32 %v67, %v70
      %72 = vrot.lane.b32.xlu0 %v68, 16
      %v73 = vpop.permute.xlu0 %72
      %v74 = vadd.f32 %v68, %v73
      %75 = vrot.lane.b32.xlu0 %v67, 32
      %v76 = vpop.permute.xlu0 %75
      %v77 = vadd.f32 %v71, %v76
      %78 = vrot.lane.b32.xlu0 %v68, 32
      %v79 = vpop.permute.xlu0 %78
      %v80 = vadd.f32 %v74, %v79
      %81 = vrot.lane.b32.xlu0 %v67, 48
      %v82 = vpop.permute.xlu0 %81
      %v83 = vadd.f32 %v77, %v82
      %84 = vrot.lane.b32.xlu0 %v68, 48
      %v85 = vpop.permute.xlu0 %84
      %v86 = vadd.f32 %v80, %v85
      %87 = vrot.lane.b32.xlu0 %v67, 64
      %v88 = vpop.permute.xlu0 %87
      %v89 = vadd.f32 %v83, %v88
      %90 = vrot.lane.b32.xlu0 %v68, 64
      %v91 = vpop.permute.xlu0 %90
      %v92 = vadd.f32 %v86, %v91
      %93 = vrot.lane.b32.xlu0 %v67, 80
      %v94 = vpop.permute.xlu0 %93
      %v95 = vadd.f32 %v89, %v94
      %96 = vrot.lane.b32.xlu0 %v68, 80
      %v97 = vpop.permute.xlu0 %96
      %v98 = vadd.f32 %v92, %v97
      %99 = vrot.lane.b32.xlu0 %v67, 96
      %v100 = vpop.permute.xlu0 %99
      %v101 = vadd.f32 %v95, %v100
      %102 = vrot.lane.b32.xlu0 %v68, 96
      %v103 = vpop.permute.xlu0 %102
      %v104 = vadd.f32 %v98, %v103
      %105 = vrot.lane.b32.xlu0 %v67, 112
      %v106 = vpop.permute.xlu0 %105
      %v107 = vadd.f32 %v101, %v106
      %108 = vrot.lane.b32.xlu0 %v68, 112
      %v109 = vpop.permute.xlu0 %108
      %v110 = vadd.f32 %v104, %v109
      %v111 = vmul.f32 %v107, 0.0078125
      %v112 = vmul.f32 %v110, 0.0078125
      %v113 = vmul.f32 %v111, %v111
      %v114 = vsub.f32 %v112, %v113
      %v115 = vadd.f32 %v114, 1e-05
      %v116 = vrsqrt.pop %v115
      %v117 = vld [vmem:[%s1] sm:$0x1]
      %v118 = vmul.f32 %v117, %v116
      %119 = vst [vmem:[#allocation7] sm:$0x1] %v118
      %v120 = vld [vmem:[%s2] sm:$0x1]
      %v121 = vmul.f32 %v111, %v118
      %v122 = vsub.f32 %v120, %v121
      %123 = vst [vmem:[#allocation8] sm:$0x1] %v122
    $region25: #{tpu_custom_call.1} parent=1 // pred_fallthru
      _
    // Predicated region
    $region26: #{tpu_custom_call.1} parent=1 // pred_check
      _
    $region27: #{tpu_custom_call.1} parent=1 // pred_check_branch
      %125 = sbr.rel (0) target = $region29
    $region28: #{tpu_custom_call.1} parent=1 // pred_region
      %s127 = ssub.s32 16, 16
      %128 = vsyncadd [#allocation6], %s127
      %s130 = sshll.u32 [#allocation7], 4
      %s131 = int_to_ptr.vmem [resolvable:$true] %s130
      %133 = dma.vmem_to_hbm [thread:$0]  %s131, 16, %s3, [#allocation6]
    $region29: #{tpu_custom_call.1} parent=1 // pred_fallthru
      _
    // Predicated region
    $region30: #{tpu_custom_call.1} parent=1 // pred_check
      _
    $region31: #{tpu_custom_call.1} parent=1 // pred_check_branch
      %135 = sbr.rel (0) target = $region33
    $region32: #{tpu_custom_call.1} parent=1 // pred_region
      %s137 = ssub.s32 16, 16
      %138 = vsyncadd [#allocation9], %s137
      %s140 = sshll.u32 [#allocation8], 4
      %s141 = int_to_ptr.vmem [resolvable:$true] %s140
      %143 = dma.vmem_to_hbm [thread:$0]  %s141, 16, %s4, [#allocation9]
    $region33: #{tpu_custom_call.1} parent=1 // pred_fallthru
      _
    // Predicated region
    $region34: #{tpu_custom_call.1} parent=1 // pred_check
      _
    $region35: #{tpu_custom_call.1} parent=1 // pred_check_branch
      %145 = sbr.rel (0) target = $region37
    $region36: #{tpu_custom_call.1} parent=1 // pred_region
      %146 = dma.done [#allocation6], 16
    $region37: #{tpu_custom_call.1} parent=1 // pred_fallthru
      _
    // Predicated region
    $region38: #{tpu_custom_call.1} parent=1 // pred_check
      _
    $region39: #{tpu_custom_call.1} parent=1 // pred_check_branch
      %148 = sbr.rel (0) target = $region41
    $region40: #{tpu_custom_call.1} parent=1 // pred_region
      %149 = dma.done [#allocation9], 16
    $region41: #{tpu_custom_call.1} parent=1 // pred_fallthru
      _
    %150 = vsyncpa [#allocation5], 1
    %151 = vsyncpa [#allocation6], 1
    %152 = vsyncpa [#allocation9], 1

</llo_original>
